<compile_context>
chip_gen: v7x
topology: tpu7x:2x2x1
jax: 0.10.0
libtpu: 0.0.40
codegen_flags: <defaults>
</compile_context>

<pallas_src>
import jax
import jax.numpy as jnp
from jax.experimental import pallas as pl
from jax.experimental.pallas import tpu as pltpu

BN_EPS = 1e-5


# ---------------------------------------------------------------------------
# VMEM budget (generation-aware: v7x has 64 MiB physical, v5e/v6e have 128 MiB)
# ---------------------------------------------------------------------------
def _vmem_budget_bytes():
    try:
        cap = pltpu.get_tpu_info().vmem_capacity_bytes
    except Exception:
        cap = 64 * 1024 * 1024  # conservative (v7x physical) fallback
    return int(cap * 3 // 4)     # leave headroom for compiler scratch / semaphores


_VMEM_BUDGET = _vmem_budget_bytes()
# ~120 f32 bytes of resident activations per batch element (x, h1, h2, z, out + slack).
_MAX_N = max(1, (_VMEM_BUDGET - (1 << 20)) // 120)


# ---------------------------------------------------------------------------
# Kernel helpers
# ---------------------------------------------------------------------------
def _linear_cols(x_rows, w, b_col):
    """h = W @ x + b via unrolled VPU broadcast-FMAs.

    x_rows: (Fin, T)   batch on lanes
    w:      (Fout, Fin) torch nn.Linear convention
    b_col:  (Fout, 1)
    returns (Fout, T)
    """
    fin = w.shape[1]
    acc = w[:, 0:1] * x_rows[0:1, :] + b_col   # (Fout,1)*(1,T) -> (Fout,T)
    for k in range(1, fin):                    # static unroll (fin is 4 or 8)
        acc = acc + w[:, k:k + 1] * x_rows[k:k + 1, :]
    return acc


def _bn_affine(h, gamma_col, beta_col, relu):
    """Training-mode BatchNorm1d folded into one affine pass (+ optional fused ReLU).

    Two independent cross-lane (XLU) reduces, then a single h*s + t elementwise pass.
    Variance via E[h^2] - m^2, clamped at 0 to guard against cancellation.
    """
    m = jnp.mean(h, axis=-1, keepdims=True)            # (F, 1)
    q = jnp.mean(h * h, axis=-1, keepdims=True)        # (F, 1), independent of m
    var = jnp.maximum(q - m * m, 0.0)                  # biased variance, clamped
    s = gamma_col * jax.lax.rsqrt(var + BN_EPS)        # (F, 1)
    t = beta_col - m * s                               # (F, 1)
    y = h * s + t
    if relu:
        y = jnp.maximum(y, 0.0)
    return y


def uti_kernel(xt_ref, p_ref, o_ref):
    # xt_ref: (4, N) f32, batch on lanes.
    # p_ref : (8, 32) f32 packed parameters (single tiny DMA), column layout:
    #   [ w1(8x4) | b1 g1 be1 | w2(4x8, rows 0:4) | b2 g2 be2 | w3(1x4, row 0) | b3 g3 be3 | pad ]
    x = xt_ref[...]                                   # already f32
    p = p_ref[...]

    # --- unpack (static, in-register slices of one vreg) ---
    w1 = p[0:8, 0:4]
    b1, g1, be1 = p[0:8, 4:5], p[0:8, 5:6], p[0:8, 6:7]
    w2 = p[0:4, 7:15]
    b2, g2, be2 = p[0:4, 15:16], p[0:4, 16:17], p[0:4, 17:18]
    w3 = p[0:1, 18:22]
    b3, g3, be3 = p[0:1, 22:23], p[0:1, 23:24], p[0:1, 24:25]

    # Layer 1: Linear(4 -> 8) + BN(8) + ReLU
    h = _linear_cols(x, w1, b1)                       # (8, N)
    h = _bn_affine(h, g1, be1, relu=True)

    # Layer 2: Linear(8 -> 4) + BN(4) + ReLU
    h = _linear_cols(h, w2, b2)                       # (4, N)
    h = _bn_affine(h, g2, be2, relu=True)

    # Layer 3: Linear(4 -> 1) + BN(1) + Sigmoid
    z = _linear_cols(h, w3, b3)                       # (1, N)
    z = _bn_affine(z, g3, be3, relu=False)

    # sigmoid = 1 / (1 + exp(-z)); exp on EUP, approx reciprocal on EUP.
    o_ref[...] = pl.reciprocal(1.0 + jnp.exp(-z), approx=True).astype(o_ref.dtype)


# ---------------------------------------------------------------------------
# Wrapper
# ---------------------------------------------------------------------------
def pack_params(params):
    """Pack the 13 parameter tensors into ONE (8, 32) f32 array. Call once and reuse."""
    assert params["w3"].shape[0] == 1, "packed layout assumes output_dim == 1"
    P = jnp.zeros((8, 32), jnp.float32)
    P = P.at[0:8, 0:4].set(params["w1"].astype(jnp.float32))
    P = P.at[0:8, 4].set(params["b1"].astype(jnp.float32))
    P = P.at[0:8, 5].set(params["g1"].astype(jnp.float32))
    P = P.at[0:8, 6].set(params["be1"].astype(jnp.float32))
    P = P.at[0:4, 7:15].set(params["w2"].astype(jnp.float32))
    P = P.at[0:4, 15].set(params["b2"].astype(jnp.float32))
    P = P.at[0:4, 16].set(params["g2"].astype(jnp.float32))
    P = P.at[0:4, 17].set(params["be2"].astype(jnp.float32))
    P = P.at[0:1, 18:22].set(params["w3"].astype(jnp.float32))
    P = P.at[0:1, 22].set(params["b3"].astype(jnp.float32))
    P = P.at[0:1, 23].set(params["g3"].astype(jnp.float32))
    P = P.at[0:1, 24].set(params["be3"].astype(jnp.float32))
    return P


@jax.jit
def uti_prediction(x, packed_params):
    """x: (N, 4) float32; packed_params from pack_params(). Returns (N, 1) float32."""
    n = x.shape[0]
    # Whole-batch resident (training-mode BN needs exact full-batch stats per layer).
    assert n <= _MAX_N, (
        f"batch {n} too large for whole-batch-resident BN kernel on this TPU "
        f"(max {_MAX_N}); see TODO(synk) tiled two-pass scheme"
    )

    # (4, N): features -> sublanes, batch -> lanes. The transpose fuses into the
    # pallas_call operand (allow_input_fusion) under jit instead of being its own launch.
    xt = x.T

    vmem = pl.BlockSpec(memory_space=pltpu.MemorySpace.VMEM)
    out_t = pl.pallas_call(
        uti_kernel,
        out_shape=jax.ShapeDtypeStruct((1, n), jnp.float32),   # lane-dense output
        in_specs=[vmem, vmem],
        out_specs=vmem,
        compiler_params=pltpu.CompilerParams(
            vmem_limit_bytes=_VMEM_BUDGET,
            allow_input_fusion=[True, False],   # fuse the x transpose into operand 0
        ),
    )(xt, packed_params)
    return out_t.T                                     # back to (N, 1) torch layout


# ---------------------------------------------------------------------------
# Synthetic parameters + pure-JAX reference
# ---------------------------------------------------------------------------
def init_params(key, output_dim=1):
    """Linear weights use torch convention (out, in); bias/gamma/beta are (out,)."""
    ks = jax.random.split(key, 12)
    p = {}
    p["w1"] = jax.random.normal(ks[0], (8, 4), jnp.float32) * 0.5
    p["b1"] = jax.random.normal(ks[1], (8,), jnp.float32) * 0.1
    p["g1"] = 1.0 + 0.1 * jax.random.normal(ks[2], (8,), jnp.float32)
    p["be1"] = 0.1 * jax.random.normal(ks[3], (8,), jnp.float32)
    p["w2"] = jax.random.normal(ks[4], (4, 8), jnp.float32) * 0.5
    p["b2"] = jax.random.normal(ks[5], (4,), jnp.float32) * 0.1
    p["g2"] = 1.0 + 0.1 * jax.random.normal(ks[6], (4,), jnp.float32)
    p["be2"] = 0.1 * jax.random.normal(ks[7], (4,), jnp.float32)
    p["w3"] = jax.random.normal(ks[8], (output_dim, 4), jnp.float32) * 0.5
    p["b3"] = jax.random.normal(ks[9], (output_dim,), jnp.float32) * 0.1
    p["g3"] = 1.0 + 0.1 * jax.random.normal(ks[10], (output_dim,), jnp.float32)
    p["be3"] = 0.1 * jax.random.normal(ks[11], (output_dim,), jnp.float32)
    return p


def _reference(x, p):
    """Pure-JAX reference of the same forward (PyTorch training-mode BN)."""
    def bn(h, g, b):
        m = jnp.mean(h, axis=0, keepdims=True)
        v = jnp.mean((h - m) ** 2, axis=0, keepdims=True)
        return (h - m) / jnp.sqrt(v + BN_EPS) * g + b

    h = jnp.maximum(bn(x @ p["w1"].T + p["b1"], p["g1"], p["be1"]), 0.0)
    h = jnp.maximum(bn(h @ p["w2"].T + p["b2"], p["g2"], p["be2"]), 0.0)
    z = bn(h @ p["w3"].T + p["b3"], p["g3"], p["be3"])
    return jax.nn.sigmoid(z)


if __name__ == "__main__":
    key = jax.random.PRNGKey(0)
    k_x, k_p = jax.random.split(key)

    N = 256  # small batch, multiple of 128 -> fully lane-dense vregs and stores
    x = jax.random.normal(k_x, (N, 4), jnp.float32)
    params = init_params(k_p, output_dim=1)
    packed = pack_params(params)        # built once, reused across calls

    out = jax.block_until_ready(uti_prediction(x, packed))

    ref = _reference(x, params)
    assert out.shape == (N, 1)
    # approx=True reciprocal + E[h^2]-m^2 variance: allow a slightly loose tolerance.
    assert jnp.allclose(out, ref, atol=2e-3), "mismatch vs pure-JAX reference"

    print("KERNEL_OK")
</pallas_src>

<mosaic_0001>
module attributes {stable_mosaic.version = 11 : i64} {
  func.func @uti_kernel(%arg0: memref<4x256xf32, #tpu.memory_space<vmem>>, %arg1: memref<8x32xf32, #tpu.memory_space<vmem>>, %arg2: memref<1x256xf32, #tpu.memory_space<vmem>>) attributes {dimension_semantics = [], scalar_prefetch = 0 : i64, scratch_operands = 0 : i64, tpu.core_type = #tpu.core_type<tc>} {
    %c0 = arith.constant 0 : index
    %c0_0 = arith.constant 0 : index
    %0 = vector.load %arg0[%c0, %c0_0] : memref<4x256xf32, #tpu.memory_space<vmem>>, vector<4x256xf32>
    %c0_1 = arith.constant 0 : index
    %c0_2 = arith.constant 0 : index
    %1 = vector.load %arg1[%c0_1, %c0_2] : memref<8x32xf32, #tpu.memory_space<vmem>>, vector<8x32xf32>
    %2 = vector.extract_strided_slice %1 {offsets = [0, 0], sizes = [8, 4], strides = [1, 1]} : vector<8x32xf32> to vector<8x4xf32>
    %3 = vector.extract_strided_slice %1 {offsets = [0, 4], sizes = [8, 1], strides = [1, 1]} : vector<8x32xf32> to vector<8x1xf32>
    %4 = vector.extract_strided_slice %1 {offsets = [0, 5], sizes = [8, 1], strides = [1, 1]} : vector<8x32xf32> to vector<8x1xf32>
    %5 = vector.extract_strided_slice %1 {offsets = [0, 6], sizes = [8, 1], strides = [1, 1]} : vector<8x32xf32> to vector<8x1xf32>
    %6 = vector.extract_strided_slice %1 {offsets = [0, 7], sizes = [4, 8], strides = [1, 1]} : vector<8x32xf32> to vector<4x8xf32>
    %7 = vector.extract_strided_slice %1 {offsets = [0, 15], sizes = [4, 1], strides = [1, 1]} : vector<8x32xf32> to vector<4x1xf32>
    %8 = vector.extract_strided_slice %1 {offsets = [0, 16], sizes = [4, 1], strides = [1, 1]} : vector<8x32xf32> to vector<4x1xf32>
    %9 = vector.extract_strided_slice %1 {offsets = [0, 17], sizes = [4, 1], strides = [1, 1]} : vector<8x32xf32> to vector<4x1xf32>
    %10 = vector.extract_strided_slice %1 {offsets = [0, 18], sizes = [1, 4], strides = [1, 1]} : vector<8x32xf32> to vector<1x4xf32>
    %11 = vector.extract_strided_slice %1 {offsets = [0, 22], sizes = [1, 1], strides = [1, 1]} : vector<8x32xf32> to vector<1x1xf32>
    %12 = vector.extract_strided_slice %1 {offsets = [0, 23], sizes = [1, 1], strides = [1, 1]} : vector<8x32xf32> to vector<1x1xf32>
    %13 = vector.extract_strided_slice %1 {offsets = [0, 24], sizes = [1, 1], strides = [1, 1]} : vector<8x32xf32> to vector<1x1xf32>
    %14 = vector.extract_strided_slice %2 {offsets = [0, 0], sizes = [8, 1], strides = [1, 1]} : vector<8x4xf32> to vector<8x1xf32>
    %15 = vector.extract_strided_slice %0 {offsets = [0, 0], sizes = [1, 256], strides = [1, 1]} : vector<4x256xf32> to vector<1x256xf32>
    %16 = vector.broadcast %14 : vector<8x1xf32> to vector<8x256xf32>
    %17 = vector.broadcast %15 : vector<1x256xf32> to vector<8x256xf32>
    %18 = arith.mulf %16, %17 : vector<8x256xf32>
    %19 = vector.broadcast %3 : vector<8x1xf32> to vector<8x256xf32>
    %20 = arith.addf %18, %19 : vector<8x256xf32>
    %21 = vector.extract_strided_slice %2 {offsets = [0, 1], sizes = [8, 1], strides = [1, 1]} : vector<8x4xf32> to vector<8x1xf32>
    %22 = vector.extract_strided_slice %0 {offsets = [1, 0], sizes = [1, 256], strides = [1, 1]} : vector<4x256xf32> to vector<1x256xf32>
    %23 = vector.broadcast %21 : vector<8x1xf32> to vector<8x256xf32>
    %24 = vector.broadcast %22 : vector<1x256xf32> to vector<8x256xf32>
    %25 = arith.mulf %23, %24 : vector<8x256xf32>
    %26 = arith.addf %20, %25 : vector<8x256xf32>
    %27 = vector.extract_strided_slice %2 {offsets = [0, 2], sizes = [8, 1], strides = [1, 1]} : vector<8x4xf32> to vector<8x1xf32>
    %28 = vector.extract_strided_slice %0 {offsets = [2, 0], sizes = [1, 256], strides = [1, 1]} : vector<4x256xf32> to vector<1x256xf32>
    %29 = vector.broadcast %27 : vector<8x1xf32> to vector<8x256xf32>
    %30 = vector.broadcast %28 : vector<1x256xf32> to vector<8x256xf32>
    %31 = arith.mulf %29, %30 : vector<8x256xf32>
    %32 = arith.addf %26, %31 : vector<8x256xf32>
    %33 = vector.extract_strided_slice %2 {offsets = [0, 3], sizes = [8, 1], strides = [1, 1]} : vector<8x4xf32> to vector<8x1xf32>
    %34 = vector.extract_strided_slice %0 {offsets = [3, 0], sizes = [1, 256], strides = [1, 1]} : vector<4x256xf32> to vector<1x256xf32>
    %35 = vector.broadcast %33 : vector<8x1xf32> to vector<8x256xf32>
    %36 = vector.broadcast %34 : vector<1x256xf32> to vector<8x256xf32>
    %37 = arith.mulf %35, %36 : vector<8x256xf32>
    %38 = arith.addf %32, %37 : vector<8x256xf32>
    %cst = arith.constant dense<0.000000e+00> : vector<8xf32>
    %39 = vector.multi_reduction <add>, %38, %cst [1] : vector<8x256xf32> to vector<8xf32>
    %40 = vector.shape_cast %39 : vector<8xf32> to vector<8x1xf32>
    %cst_3 = arith.constant 2.560000e+02 : f32
    %41 = vector.broadcast %cst_3 : f32 to vector<8x1xf32>
    %42 = arith.divf %40, %41 : vector<8x1xf32>
    %43 = arith.mulf %38, %38 : vector<8x256xf32>
    %cst_4 = arith.constant dense<0.000000e+00> : vector<8xf32>
    %44 = vector.multi_reduction <add>, %43, %cst_4 [1] : vector<8x256xf32> to vector<8xf32>
    %45 = vector.shape_cast %44 : vector<8xf32> to vector<8x1xf32>
    %cst_5 = arith.constant 2.560000e+02 : f32
    %46 = vector.broadcast %cst_5 : f32 to vector<8x1xf32>
    %47 = arith.divf %45, %46 : vector<8x1xf32>
    %48 = arith.mulf %42, %42 : vector<8x1xf32>
    %49 = arith.subf %47, %48 : vector<8x1xf32>
    %cst_6 = arith.constant 0.000000e+00 : f32
    %50 = vector.broadcast %cst_6 : f32 to vector<8x1xf32>
    %51 = arith.maximumf %49, %50 : vector<8x1xf32>
    %cst_7 = arith.constant 9.99999974E-6 : f32
    %52 = vector.broadcast %cst_7 : f32 to vector<8x1xf32>
    %53 = arith.addf %51, %52 : vector<8x1xf32>
    %54 = math.rsqrt %53 : vector<8x1xf32>
    %55 = arith.mulf %4, %54 : vector<8x1xf32>
    %56 = arith.mulf %42, %55 : vector<8x1xf32>
    %57 = arith.subf %5, %56 : vector<8x1xf32>
    %58 = vector.broadcast %55 : vector<8x1xf32> to vector<8x256xf32>
    %59 = arith.mulf %38, %58 : vector<8x256xf32>
    %60 = vector.broadcast %57 : vector<8x1xf32> to vector<8x256xf32>
    %61 = arith.addf %59, %60 : vector<8x256xf32>
    %cst_8 = arith.constant 0.000000e+00 : f32
    %62 = vector.broadcast %cst_8 : f32 to vector<8x256xf32>
    %63 = arith.maximumf %61, %62 : vector<8x256xf32>
    %64 = vector.extract_strided_slice %6 {offsets = [0, 0], sizes = [4, 1], strides = [1, 1]} : vector<4x8xf32> to vector<4x1xf32>
    %65 = vector.extract_strided_slice %63 {offsets = [0, 0], sizes = [1, 256], strides = [1, 1]} : vector<8x256xf32> to vector<1x256xf32>
    %66 = vector.broadcast %64 : vector<4x1xf32> to vector<4x256xf32>
    %67 = vector.broadcast %65 : vector<1x256xf32> to vector<4x256xf32>
    %68 = arith.mulf %66, %67 : vector<4x256xf32>
    %69 = vector.broadcast %7 : vector<4x1xf32> to vector<4x256xf32>
    %70 = arith.addf %68, %69 : vector<4x256xf32>
    %71 = vector.extract_strided_slice %6 {offsets = [0, 1], sizes = [4, 1], strides = [1, 1]} : vector<4x8xf32> to vector<4x1xf32>
    %72 = vector.extract_strided_slice %63 {offsets = [1, 0], sizes = [1, 256], strides = [1, 1]} : vector<8x256xf32> to vector<1x256xf32>
    %73 = vector.broadcast %71 : vector<4x1xf32> to vector<4x256xf32>
    %74 = vector.broadcast %72 : vector<1x256xf32> to vector<4x256xf32>
    %75 = arith.mulf %73, %74 : vector<4x256xf32>
    %76 = arith.addf %70, %75 : vector<4x256xf32>
    %77 = vector.extract_strided_slice %6 {offsets = [0, 2], sizes = [4, 1], strides = [1, 1]} : vector<4x8xf32> to vector<4x1xf32>
    %78 = vector.extract_strided_slice %63 {offsets = [2, 0], sizes = [1, 256], strides = [1, 1]} : vector<8x256xf32> to vector<1x256xf32>
    %79 = vector.broadcast %77 : vector<4x1xf32> to vector<4x256xf32>
    %80 = vector.broadcast %78 : vector<1x256xf32> to vector<4x256xf32>
    %81 = arith.mulf %79, %80 : vector<4x256xf32>
    %82 = arith.addf %76, %81 : vector<4x256xf32>
    %83 = vector.extract_strided_slice %6 {offsets = [0, 3], sizes = [4, 1], strides = [1, 1]} : vector<4x8xf32> to vector<4x1xf32>
    %84 = vector.extract_strided_slice %63 {offsets = [3, 0], sizes = [1, 256], strides = [1, 1]} : vector<8x256xf32> to vector<1x256xf32>
    %85 = vector.broadcast %83 : vector<4x1xf32> to vector<4x256xf32>
    %86 = vector.broadcast %84 : vector<1x256xf32> to vector<4x256xf32>
    %87 = arith.mulf %85, %86 : vector<4x256xf32>
    %88 = arith.addf %82, %87 : vector<4x256xf32>
    %89 = vector.extract_strided_slice %6 {offsets = [0, 4], sizes = [4, 1], strides = [1, 1]} : vector<4x8xf32> to vector<4x1xf32>
    %90 = vector.extract_strided_slice %63 {offsets = [4, 0], sizes = [1, 256], strides = [1, 1]} : vector<8x256xf32> to vector<1x256xf32>
    %91 = vector.broadcast %89 : vector<4x1xf32> to vector<4x256xf32>
    %92 = vector.broadcast %90 : vector<1x256xf32> to vector<4x256xf32>
    %93 = arith.mulf %91, %92 : vector<4x256xf32>
    %94 = arith.addf %88, %93 : vector<4x256xf32>
    %95 = vector.extract_strided_slice %6 {offsets = [0, 5], sizes = [4, 1], strides = [1, 1]} : vector<4x8xf32> to vector<4x1xf32>
    %96 = vector.extract_strided_slice %63 {offsets = [5, 0], sizes = [1, 256], strides = [1, 1]} : vector<8x256xf32> to vector<1x256xf32>
    %97 = vector.broadcast %95 : vector<4x1xf32> to vector<4x256xf32>
    %98 = vector.broadcast %96 : vector<1x256xf32> to vector<4x256xf32>
    %99 = arith.mulf %97, %98 : vector<4x256xf32>
    %100 = arith.addf %94, %99 : vector<4x256xf32>
    %101 = vector.extract_strided_slice %6 {offsets = [0, 6], sizes = [4, 1], strides = [1, 1]} : vector<4x8xf32> to vector<4x1xf32>
    %102 = vector.extract_strided_slice %63 {offsets = [6, 0], sizes = [1, 256], strides = [1, 1]} : vector<8x256xf32> to vector<1x256xf32>
    %103 = vector.broadcast %101 : vector<4x1xf32> to vector<4x256xf32>
    %104 = vector.broadcast %102 : vector<1x256xf32> to vector<4x256xf32>
    %105 = arith.mulf %103, %104 : vector<4x256xf32>
    %106 = arith.addf %100, %105 : vector<4x256xf32>
    %107 = vector.extract_strided_slice %6 {offsets = [0, 7], sizes = [4, 1], strides = [1, 1]} : vector<4x8xf32> to vector<4x1xf32>
    %108 = vector.extract_strided_slice %63 {offsets = [7, 0], sizes = [1, 256], strides = [1, 1]} : vector<8x256xf32> to vector<1x256xf32>
    %109 = vector.broadcast %107 : vector<4x1xf32> to vector<4x256xf32>
    %110 = vector.broadcast %108 : vector<1x256xf32> to vector<4x256xf32>
    %111 = arith.mulf %109, %110 : vector<4x256xf32>
    %112 = arith.addf %106, %111 : vector<4x256xf32>
    %cst_9 = arith.constant dense<0.000000e+00> : vector<4xf32>
    %113 = vector.multi_reduction <add>, %112, %cst_9 [1] : vector<4x256xf32> to vector<4xf32>
    %114 = vector.shape_cast %113 : vector<4xf32> to vector<4x1xf32>
    %cst_10 = arith.constant 2.560000e+02 : f32
    %115 = vector.broadcast %cst_10 : f32 to vector<4x1xf32>
    %116 = arith.divf %114, %115 : vector<4x1xf32>
    %117 = arith.mulf %112, %112 : vector<4x256xf32>
    %cst_11 = arith.constant dense<0.000000e+00> : vector<4xf32>
    %118 = vector.multi_reduction <add>, %117, %cst_11 [1] : vector<4x256xf32> to vector<4xf32>
    %119 = vector.shape_cast %118 : vector<4xf32> to vector<4x1xf32>
    %cst_12 = arith.constant 2.560000e+02 : f32
    %120 = vector.broadcast %cst_12 : f32 to vector<4x1xf32>
    %121 = arith.divf %119, %120 : vector<4x1xf32>
    %122 = arith.mulf %116, %116 : vector<4x1xf32>
    %123 = arith.subf %121, %122 : vector<4x1xf32>
    %cst_13 = arith.constant 0.000000e+00 : f32
    %124 = vector.broadcast %cst_13 : f32 to vector<4x1xf32>
    %125 = arith.maximumf %123, %124 : vector<4x1xf32>
    %cst_14 = arith.constant 9.99999974E-6 : f32
    %126 = vector.broadcast %cst_14 : f32 to vector<4x1xf32>
    %127 = arith.addf %125, %126 : vector<4x1xf32>
    %128 = math.rsqrt %127 : vector<4x1xf32>
    %129 = arith.mulf %8, %128 : vector<4x1xf32>
    %130 = arith.mulf %116, %129 : vector<4x1xf32>
    %131 = arith.subf %9, %130 : vector<4x1xf32>
    %132 = vector.broadcast %129 : vector<4x1xf32> to vector<4x256xf32>
    %133 = arith.mulf %112, %132 : vector<4x256xf32>
    %134 = vector.broadcast %131 : vector<4x1xf32> to vector<4x256xf32>
    %135 = arith.addf %133, %134 : vector<4x256xf32>
    %cst_15 = arith.constant 0.000000e+00 : f32
    %136 = vector.broadcast %cst_15 : f32 to vector<4x256xf32>
    %137 = arith.maximumf %135, %136 : vector<4x256xf32>
    %138 = vector.extract_strided_slice %10 {offsets = [0, 0], sizes = [1, 1], strides = [1, 1]} : vector<1x4xf32> to vector<1x1xf32>
    %139 = vector.extract_strided_slice %137 {offsets = [0, 0], sizes = [1, 256], strides = [1, 1]} : vector<4x256xf32> to vector<1x256xf32>
    %140 = vector.broadcast %138 : vector<1x1xf32> to vector<1x256xf32>
    %141 = arith.mulf %140, %139 : vector<1x256xf32>
    %142 = vector.broadcast %11 : vector<1x1xf32> to vector<1x256xf32>
    %143 = arith.addf %141, %142 : vector<1x256xf32>
    %144 = vector.extract_strided_slice %10 {offsets = [0, 1], sizes = [1, 1], strides = [1, 1]} : vector<1x4xf32> to vector<1x1xf32>
    %145 = vector.extract_strided_slice %137 {offsets = [1, 0], sizes = [1, 256], strides = [1, 1]} : vector<4x256xf32> to vector<1x256xf32>
    %146 = vector.broadcast %144 : vector<1x1xf32> to vector<1x256xf32>
    %147 = arith.mulf %146, %145 : vector<1x256xf32>
    %148 = arith.addf %143, %147 : vector<1x256xf32>
    %149 = vector.extract_strided_slice %10 {offsets = [0, 2], sizes = [1, 1], strides = [1, 1]} : vector<1x4xf32> to vector<1x1xf32>
    %150 = vector.extract_strided_slice %137 {offsets = [2, 0], sizes = [1, 256], strides = [1, 1]} : vector<4x256xf32> to vector<1x256xf32>
    %151 = vector.broadcast %149 : vector<1x1xf32> to vector<1x256xf32>
    %152 = arith.mulf %151, %150 : vector<1x256xf32>
    %153 = arith.addf %148, %152 : vector<1x256xf32>
    %154 = vector.extract_strided_slice %10 {offsets = [0, 3], sizes = [1, 1], strides = [1, 1]} : vector<1x4xf32> to vector<1x1xf32>
    %155 = vector.extract_strided_slice %137 {offsets = [3, 0], sizes = [1, 256], strides = [1, 1]} : vector<4x256xf32> to vector<1x256xf32>
    %156 = vector.broadcast %154 : vector<1x1xf32> to vector<1x256xf32>
    %157 = arith.mulf %156, %155 : vector<1x256xf32>
    %158 = arith.addf %153, %157 : vector<1x256xf32>
    %cst_16 = arith.constant dense<0.000000e+00> : vector<1xf32>
    %159 = vector.multi_reduction <add>, %158, %cst_16 [1] : vector<1x256xf32> to vector<1xf32>
    %160 = vector.shape_cast %159 : vector<1xf32> to vector<1x1xf32>
    %cst_17 = arith.constant 2.560000e+02 : f32
    %161 = vector.broadcast %cst_17 : f32 to vector<1x1xf32>
    %162 = arith.divf %160, %161 : vector<1x1xf32>
    %163 = arith.mulf %158, %158 : vector<1x256xf32>
    %cst_18 = arith.constant dense<0.000000e+00> : vector<1xf32>
    %164 = vector.multi_reduction <add>, %163, %cst_18 [1] : vector<1x256xf32> to vector<1xf32>
    %165 = vector.shape_cast %164 : vector<1xf32> to vector<1x1xf32>
    %cst_19 = arith.constant 2.560000e+02 : f32
    %166 = vector.broadcast %cst_19 : f32 to vector<1x1xf32>
    %167 = arith.divf %165, %166 : vector<1x1xf32>
    %168 = arith.mulf %162, %162 : vector<1x1xf32>
    %169 = arith.subf %167, %168 : vector<1x1xf32>
    %cst_20 = arith.constant 0.000000e+00 : f32
    %170 = vector.broadcast %cst_20 : f32 to vector<1x1xf32>
    %171 = arith.maximumf %169, %170 : vector<1x1xf32>
    %cst_21 = arith.constant 9.99999974E-6 : f32
    %172 = vector.broadcast %cst_21 : f32 to vector<1x1xf32>
    %173 = arith.addf %171, %172 : vector<1x1xf32>
    %174 = math.rsqrt %173 : vector<1x1xf32>
    %175 = arith.mulf %12, %174 : vector<1x1xf32>
    %176 = arith.mulf %162, %175 : vector<1x1xf32>
    %177 = arith.subf %13, %176 : vector<1x1xf32>
    %178 = vector.broadcast %175 : vector<1x1xf32> to vector<1x256xf32>
    %179 = arith.mulf %158, %178 : vector<1x256xf32>
    %180 = vector.broadcast %177 : vector<1x1xf32> to vector<1x256xf32>
    %181 = arith.addf %179, %180 : vector<1x256xf32>
    %cst_22 = arith.constant 0.000000e+00 : f32
    %182 = vector.broadcast %cst_22 : f32 to vector<1x256xf32>
    %183 = arith.subf %182, %181 : vector<1x256xf32>
    %184 = math.exp %183 : vector<1x256xf32>
    %cst_23 = arith.constant 1.000000e+00 : f32
    %185 = vector.broadcast %cst_23 : f32 to vector<1x256xf32>
    %186 = arith.addf %185, %184 : vector<1x256xf32>
    %187 = tpu.reciprocal %186 {approx = true} : vector<1x256xf32> -> vector<1x256xf32>
    %c0_24 = arith.constant 0 : index
    %c0_25 = arith.constant 0 : index
    %188 = vector.load %arg2[%c0_24, %c0_25] : memref<1x256xf32, #tpu.memory_space<vmem>>, vector<1x256xf32>
    tpu.vector_store %arg2[%c0_24, %c0_25], %187 {strides = array<i32>} : memref<1x256xf32, #tpu.memory_space<vmem>>, vector<1x256xf32>,
    return
  }
}

</mosaic_0001>

<llo_original>
// kernel: uti_prediction.2
$region0: #{uti_prediction.2}
  #allocation0 [shape = 'u32[]', space=smem, size = 0x4, offset = 0x4, fixed_abs, tag = 'smem constant byte address 0x4 - core index']
  #allocation1 [shape = 'u32[144,128]{1,0:T(1,128)}', space=vmem, size = 0x12000, scoped, tag = 'internal scratch']
  %s0 = inlined_call_operand.hbm [shape: f32[8,32], index: 0, kind: input, shape index: {}]
  %s1 = inlined_call_operand.vmem [shape: f32[256,4], index: 1, kind: input, shape index: {}]
  %s2 = inlined_call_operand.hbm [shape: f32[1,256], index: 2, kind: output, shape index: {}]
  %s3 = sld [smem:[#allocation0]]
  $region22: #{uti_prediction.2} parent=0
    _
  %s5 = ssub.s32 1, %s3
  %s6 = scalar_select 0, %s5, %s3
  $region1: #{uti_prediction.2} parent=0
    #allocation2 [shape = 'u8[4096]{0}', space=vmem, size = 0x1000, scoped, tag = 'input window, operand 1, single buffered']
    #allocation3 [shape = 's32[1]{0}', space=sflag, size = 0x4, scoped, tag = 'scoped memory for uti_prediction.2']
    #allocation4 [shape = 's32[1]{0}', space=sflag, size = 0x4, scoped, tag = 'scoped memory for uti_prediction.2']
    #allocation5 [shape = 'u8[1024]{0}', space=vmem, size = 0x400, scoped, tag = 'output window, operand 0, single buffered']
    #allocation6 [shape = 'u8[4096]{0}', space=vmem, size = 0x1000, dematerialized = true, scoped, tag = 'FusionAdapter Buffer %fusion.1 = f32[4,256]{1,0:T(4,128)} fusion(%param_1.1), kind=kLoop, calls=%fused_computation.1.clone, metadata={op_name="jit(uti_prediction)/transpose" stack_frame_id=7}']
    %7 = vsyncpa [#allocation3], 0
    %8 = vsyncpa [#allocation4], 0
    // Predicated region
    $region2: #{uti_prediction.2} parent=1 // pred_check
      _
    $region3: #{uti_prediction.2} parent=1 // pred_check_branch
      %10 = sbr.rel (0) target = $region5
    $region4: #{uti_prediction.2} parent=1 // pred_region
      _
    $region5: #{uti_prediction.2} parent=1 // pred_fallthru
      _
    // Predicated region
    $region6: #{uti_prediction.2} parent=1 // pred_check
      _
    $region7: #{uti_prediction.2} parent=1 // pred_check_branch
      %12 = sbr.rel (0) target = $region9
    $region8: #{uti_prediction.2} parent=1 // pred_region
      %s14 = ssub.s32 128, 128
      %15 = vsyncadd [#allocation3], %s14
      %s17 = sshll.u32 [#allocation2], 4
      %s18 = int_to_ptr.vmem [resolvable:$true] %s17
      %20 = dma.hbm_to_vmem [thread:$0]  %s0, 128, %s18, [#allocation3]
    $region9: #{uti_prediction.2} parent=1 // pred_fallthru
      _
    // Predicated region
    $region10: #{uti_prediction.2} parent=1 // pred_check
      _
    $region11: #{uti_prediction.2} parent=1 // pred_check_branch
      %22 = sbr.rel (0) target = $region13
    $region12: #{uti_prediction.2} parent=1 // pred_region
      %23 = dma.done [#allocation3], 128
    $region13: #{uti_prediction.2} parent=1 // pred_fallthru
      _
    %v24 = vld [vmem:[%s1] sm:$0xf]
    %26 = vst [vmem:[#allocation6] sm:$0xf] %v24
    %s27 = scalar_lea.vmem %s1, 4
    %v28 = vld [vmem:[%s27] sm:$0xf]
    %s29 = scalar_lea.vmem [#allocation6], 4
    %31 = vst [vmem:[%s29] sm:$0xf] %v28
    %v32 = vld [vmem:[#allocation6] sm:$0xff]
    %v33 = vld [vmem:[#allocation2] sm:$0xff]
    %35 = vset.pattern.permute.xlu0 0
    %36 = vperm.xlu0 %35, %v33
    %v37 = vpop.permute.xlu0 %36
    %v40 = vlaneseq
    %v41 = vshrl.u32 %v40, 7
    %v42 = vsub.s32 0, %v41
    %v43 = vrot.slane %v32, %v42
    %v44 = vlaneseq
    %v45 = vshrl.u32 %v44, 7
    %v46 = vsub.s32 4, %v45
    %v47 = vrot.slane %v32, %v46
    %v50 = vlaneseq
    %v51 = vshrl.u32 %v50, 7
    %v52 = vsub.s32 0, %v51
    %v53 = vrot.slane %v43, %v52
    %v54 = vlaneseq
    %v55 = vshrl.u32 %v54, 7
    %v56 = vsub.s32 0, %v55
    %v57 = vrot.slane %v47, %v56
    %v58 = vmul.f32 %v37, %v53
    %v59 = vmul.f32 %v37, %v57
    %60 = vset.pattern.permute.xlu0 4
    %61 = vperm.xlu0 %60, %v33
    %v62 = vpop.permute.xlu0 %61
    %v64 = vadd.f32 %v58, %v62
    %v65 = vadd.f32 %v59, %v62
    %66 = vset.pattern.permute.xlu0 1
    %67 = vperm.xlu0 %66, %v33
    %v68 = vpop.permute.xlu0 %67
    %v70 = vlaneseq
    %v71 = vshrl.u32 %v70, 7
    %v72 = vsub.s32 1, %v71
    %v73 = vrot.slane %v32, %v72
    %v74 = vlaneseq
    %v75 = vshrl.u32 %v74, 7
    %v76 = vsub.s32 5, %v75
    %v77 = vrot.slane %v32, %v76
    %v80 = vlaneseq
    %v81 = vshrl.u32 %v80, 7
    %v82 = vsub.s32 1, %v81
    %v83 = vrot.slane %v73, %v82
    %v84 = vlaneseq
    %v85 = vshrl.u32 %v84, 7
    %v86 = vsub.s32 1, %v85
    %v87 = vrot.slane %v77, %v86
    %v88 = vmul.f32 %v68, %v83
    %v89 = vmul.f32 %v68, %v87
    %v90 = vadd.f32 %v64, %v88
    %v91 = vadd.f32 %v65, %v89
    %92 = vset.pattern.permute.xlu0 2
    %93 = vperm.xlu0 %92, %v33
    %v94 = vpop.permute.xlu0 %93
    %v96 = vlaneseq
    %v97 = vshrl.u32 %v96, 7
    %v98 = vsub.s32 2, %v97
    %v99 = vrot.slane %v32, %v98
    %v100 = vlaneseq
    %v101 = vshrl.u32 %v100, 7
    %v102 = vsub.s32 6, %v101
    %v103 = vrot.slane %v32, %v102
    %v106 = vlaneseq
    %v107 = vshrl.u32 %v106, 7
    %v108 = vsub.s32 2, %v107
    %v109 = vrot.slane %v99, %v108
    %v110 = vlaneseq
    %v111 = vshrl.u32 %v110, 7
    %v112 = vsub.s32 2, %v111
    %v113 = vrot.slane %v103, %v112
    %v114 = vmul.f32 %v94, %v109
    %v115 = vmul.f32 %v94, %v113
    %v116 = vadd.f32 %v90, %v114
    %v117 = vadd.f32 %v91, %v115
    %118 = vset.pattern.permute.xlu0 3
    %119 = vperm.xlu0 %118, %v33
    %v120 = vpop.permute.xlu0 %119
    %v122 = vlaneseq
    %v123 = vshrl.u32 %v122, 7
    %v124 = vsub.s32 3, %v123
    %v125 = vrot.slane %v32, %v124
    %v126 = vlaneseq
    %v127 = vshrl.u32 %v126, 7
    %v128 = vsub.s32 7, %v127
    %v129 = vrot.slane %v32, %v128
    %v132 = vlaneseq
    %v133 = vshrl.u32 %v132, 7
    %v134 = vsub.s32 3, %v133
    %v135 = vrot.slane %v125, %v134
    %v136 = vlaneseq
    %v137 = vshrl.u32 %v136, 7
    %v138 = vsub.s32 3, %v137
    %v139 = vrot.slane %v129, %v138
    %v140 = vmul.f32 %v120, %v135
    %v141 = vmul.f32 %v120, %v139
    %v142 = vadd.f32 %v116, %v140
    %v143 = vadd.f32 %v117, %v141
    %v144 = vadd.f32 %v142, %v143
    %145 = vadd.xlane.f32.xlu0 %v144
    %v146 = vpop.xlane.xlu0 %145
    %v147 = vrcp.pop 256.0
    %v148 = vmul.f32 %v146, %v147
    %v149 = vmul.f32 %v142, %v142
    %v150 = vmul.f32 %v143, %v143
    %v151 = vadd.f32 %v149, %v150
    %152 = vadd.xlane.f32.xlu0 %v151
    %v153 = vpop.xlane.xlu0 %152
    %v154 = vmul.f32 %v153, %v147
    %v155 = vmul.f32 %v148, %v148
    %v156 = vsub.f32 %v154, %v155
    %v157 = vmax.f32 %v156, 0.0
    %v158 = vadd.f32 %v157, 1e-05
    %v159 = vrsqrt.pop %v158
    %v160 = vmul.f32 %v33, %v159
    %v161 = vmul.f32 %v148, %v160
    %163 = vrot.lane.b32.xlu0 %v161, 1
    %v164 = vpop.permute.xlu0 %163
    %v166 = vsub.f32 %v33, %v164
    %168 = vset.pattern.permute.xlu0 5
    %169 = vperm.xlu0 %168, %v160
    %v170 = vpop.permute.xlu0 %169
    %v172 = vmul.f32 %v142, %v170
    %v173 = vmul.f32 %v143, %v170
    %175 = vset.pattern.permute.xlu0 6
    %176 = vperm.xlu0 %175, %v166
    %v177 = vpop.permute.xlu0 %176
    %v179 = vadd.f32 %v172, %v177
    %v180 = vadd.f32 %v173, %v177
    %v181 = vmax.f32 %v179, 0.0
    %v182 = vmax.f32 %v180, 0.0
    %183 = vset.pattern.permute.xlu0 7
    %184 = vperm.xlu0 %183, %v33
    %v185 = vpop.permute.xlu0 %184
    %v187 = vlaneseq
    %v188 = vshrl.u32 %v187, 7
    %v189 = vsub.s32 0, %v188
    %v190 = vrot.slane %v181, %v189
    %v191 = vlaneseq
    %v192 = vshrl.u32 %v191, 7
    %v193 = vsub.s32 0, %v192
    %v194 = vrot.slane %v182, %v193
    %v195 = vmul.f32 %v185, %v190
    %v196 = vmul.f32 %v185, %v194
    %197 = vset.pattern.permute.xlu0 15
    %198 = vperm.xlu0 %197, %v33
    %v199 = vpop.permute.xlu0 %198
    %v201 = vadd.f32 %v195, %v199
    %v202 = vadd.f32 %v196, %v199
    %203 = vset.pattern.permute.xlu0 8
    %204 = vperm.xlu0 %203, %v33
    %v205 = vpop.permute.xlu0 %204
    %v207 = vlaneseq
    %v208 = vshrl.u32 %v207, 7
    %v209 = vsub.s32 1, %v208
    %v210 = vrot.slane %v181, %v209
    %v211 = vlaneseq
    %v212 = vshrl.u32 %v211, 7
    %v213 = vsub.s32 1, %v212
    %v214 = vrot.slane %v182, %v213
    %v215 = vmul.f32 %v205, %v210
    %v216 = vmul.f32 %v205, %v214
    %v217 = vadd.f32 %v201, %v215
    %v218 = vadd.f32 %v202, %v216
    %219 = vset.pattern.permute.xlu0 9
    %220 = vperm.xlu0 %219, %v33
    %v221 = vpop.permute.xlu0 %220
    %v223 = vlaneseq
    %v224 = vshrl.u32 %v223, 7
    %v225 = vsub.s32 2, %v224
    %v226 = vrot.slane %v181, %v225
    %v227 = vlaneseq
    %v228 = vshrl.u32 %v227, 7
    %v229 = vsub.s32 2, %v228
    %v230 = vrot.slane %v182, %v229
    %v231 = vmul.f32 %v221, %v226
    %v232 = vmul.f32 %v221, %v230
    %v233 = vadd.f32 %v217, %v231
    %v234 = vadd.f32 %v218, %v232
    %235 = vset.pattern.permute.xlu0 10
    %236 = vperm.xlu0 %235, %v33
    %v237 = vpop.permute.xlu0 %236
    %v239 = vlaneseq
    %v240 = vshrl.u32 %v239, 7
    %v241 = vsub.s32 3, %v240
    %v242 = vrot.slane %v181, %v241
    %v243 = vlaneseq
    %v244 = vshrl.u32 %v243, 7
    %v245 = vsub.s32 3, %v244
    %v246 = vrot.slane %v182, %v245
    %v247 = vmul.f32 %v237, %v242
    %v248 = vmul.f32 %v237, %v246
    %v249 = vadd.f32 %v233, %v247
    %v250 = vadd.f32 %v234, %v248
    %251 = vset.pattern.permute.xlu0 11
    %252 = vperm.xlu0 %251, %v33
    %v253 = vpop.permute.xlu0 %252
    %v255 = vlaneseq
    %v256 = vshrl.u32 %v255, 7
    %v257 = vsub.s32 4, %v256
    %v258 = vrot.slane %v181, %v257
    %v259 = vlaneseq
    %v260 = vshrl.u32 %v259, 7
    %v261 = vsub.s32 4, %v260
    %v262 = vrot.slane %v182, %v261
    %v263 = vmul.f32 %v253, %v258
    %v264 = vmul.f32 %v253, %v262
    %v265 = vadd.f32 %v249, %v263
    %v266 = vadd.f32 %v250, %v264
    %267 = vset.pattern.permute.xlu0 12
    %268 = vperm.xlu0 %267, %v33
    %v269 = vpop.permute.xlu0 %268
    %v271 = vlaneseq
    %v272 = vshrl.u32 %v271, 7
    %v273 = vsub.s32 5, %v272
    %v274 = vrot.slane %v181, %v273
    %v275 = vlaneseq
    %v276 = vshrl.u32 %v275, 7
    %v277 = vsub.s32 5, %v276
    %v278 = vrot.slane %v182, %v277
    %v279 = vmul.f32 %v269, %v274
    %v280 = vmul.f32 %v269, %v278
    %v281 = vadd.f32 %v265, %v279
    %v282 = vadd.f32 %v266, %v280
    %283 = vset.pattern.permute.xlu0 13
    %284 = vperm.xlu0 %283, %v33
    %v285 = vpop.permute.xlu0 %284
    %v287 = vlaneseq
    %v288 = vshrl.u32 %v287, 7
    %v289 = vsub.s32 6, %v288
    %v290 = vrot.slane %v181, %v289
    %v291 = vlaneseq
    %v292 = vshrl.u32 %v291, 7
    %v293 = vsub.s32 6, %v292
    %v294 = vrot.slane %v182, %v293
    %v295 = vmul.f32 %v285, %v290
    %v296 = vmul.f32 %v285, %v294
    %v297 = vadd.f32 %v281, %v295
    %v298 = vadd.f32 %v282, %v296
    %299 = vset.pattern.permute.xlu0 14
    %300 = vperm.xlu0 %299, %v33
    %v301 = vpop.permute.xlu0 %300
    %v303 = vlaneseq
    %v304 = vshrl.u32 %v303, 7
    %v305 = vsub.s32 7, %v304
    %v306 = vrot.slane %v181, %v305
    %v307 = vlaneseq
    %v308 = vshrl.u32 %v307, 7
    %v309 = vsub.s32 7, %v308
    %v310 = vrot.slane %v182, %v309
    %v311 = vmul.f32 %v301, %v306
    %v312 = vmul.f32 %v301, %v310
    %v313 = vadd.f32 %v297, %v311
    %v314 = vadd.f32 %v298, %v312
    %vm315 = vcmask 1043456
    %v316 = vsel %vm315, %v313, 0.0
    %v317 = vsel %vm315, %v314, 0.0
    %v318 = vadd.f32 %v316, %v317
    %319 = vadd.xlane.f32.xlu0 %v318
    %v320 = vpop.xlane.xlu0 %319
    %v321 = vmul.f32 %v320, %v147
    %v322 = vmul.f32 %v313, %v313
    %v323 = vmul.f32 %v314, %v314
    %v324 = vsel %vm315, %v322, 0.0
    %v325 = vsel %vm315, %v323, 0.0
    %v326 = vadd.f32 %v324, %v325
    %327 = vadd.xlane.f32.xlu0 %v326
    %v328 = vpop.xlane.xlu0 %327
    %v329 = vmul.f32 %v328, %v147
    %v330 = vmul.f32 %v321, %v321
    %v331 = vsub.f32 %v329, %v330
    %v332 = vmax.f32 %v331, 0.0
    %v333 = vadd.f32 %v332, 1e-05
    %v334 = vrsqrt.pop %v333
    %v335 = vmul.f32 %v33, %v334
    %v336 = vmul.f32 %v321, %v335
    %338 = vrot.lane.b32.xlu0 %v336, 1
    %v339 = vpop.permute.xlu0 %338
    %v341 = vsub.f32 %v33, %v339
    %343 = vset.pattern.permute.xlu0 16
    %344 = vperm.xlu0 %343, %v335
    %v345 = vpop.permute.xlu0 %344
    %v347 = vmul.f32 %v313, %v345
    %v348 = vmul.f32 %v314, %v345
    %350 = vset.pattern.permute.xlu0 17
    %351 = vperm.xlu0 %350, %v341
    %v352 = vpop.permute.xlu0 %351
    %v354 = vadd.f32 %v347, %v352
    %v355 = vadd.f32 %v348, %v352
    %v356 = vmax.f32 %v354, 0.0
    %v357 = vmax.f32 %v355, 0.0
    %358 = vset.pattern.permute.xlu0 18
    %359 = vperm.xlu0 %358, %v33
    %v360 = vpop.permute.xlu0 %359
    %v362 = vmul.f32 %v360, %v356
    %v363 = vmul.f32 %v360, %v357
    %364 = vset.pattern.permute.xlu0 22
    %365 = vperm.xlu0 %364, %v33
    %v366 = vpop.permute.xlu0 %365
    %v368 = vadd.f32 %v362, %v366
    %v369 = vadd.f32 %v363, %v366
    %370 = vset.pattern.permute.xlu0 19
    %371 = vperm.xlu0 %370, %v33
    %v372 = vpop.permute.xlu0 %371
    %v376 = vrot.slane %v356, 1
    %v377 = vrot.slane %v357, 1
    %v380 = vmul.f32 %v372, %v376
    %v381 = vmul.f32 %v372, %v377
    %v382 = vadd.f32 %v368, %v380
    %v383 = vadd.f32 %v369, %v381
    %384 = vset.pattern.permute.xlu0 20
    %385 = vperm.xlu0 %384, %v33
    %v386 = vpop.permute.xlu0 %385
    %v388 = vrot.slane %v356, 2
    %v389 = vrot.slane %v357, 2
    %v392 = vmul.f32 %v386, %v388
    %v393 = vmul.f32 %v386, %v389
    %v394 = vadd.f32 %v382, %v392
    %v395 = vadd.f32 %v383, %v393
    %396 = vset.pattern.permute.xlu0 21
    %397 = vperm.xlu0 %396, %v33
    %v398 = vpop.permute.xlu0 %397
    %v400 = vrot.slane %v356, 3
    %v401 = vrot.slane %v357, 3
    %v404 = vmul.f32 %v398, %v400
    %v405 = vmul.f32 %v398, %v401
    %v406 = vadd.f32 %v394, %v404
    %v407 = vadd.f32 %v395, %v405
    %vm408 = vcmask 1040384
    %v409 = vsel %vm408, %v406, 0.0
    %v410 = vsel %vm408, %v407, 0.0
    %v411 = vadd.f32 %v409, %v410
    %412 = vadd.xlane.f32.xlu0 %v411
    %v413 = vpop.xlane.xlu0 %412
    %v414 = vmul.f32 %v413, %v147
    %v415 = vmul.f32 %v406, %v406
    %v416 = vmul.f32 %v407, %v407
    %v417 = vsel %vm408, %v415, 0.0
    %v418 = vsel %vm408, %v416, 0.0
    %v419 = vadd.f32 %v417, %v418
    %420 = vadd.xlane.f32.xlu0 %v419
    %v421 = vpop.xlane.xlu0 %420
    %v422 = vmul.f32 %v421, %v147
    %v423 = vmul.f32 %v414, %v414
    %v424 = vsub.f32 %v422, %v423
    %v425 = vmax.f32 %v424, 0.0
    %v426 = vadd.f32 %v425, 1e-05
    %v427 = vrsqrt.pop %v426
    %v428 = vmul.f32 %v33, %v427
    %v429 = vmul.f32 %v414, %v428
    %431 = vrot.lane.b32.xlu0 %v429, 1
    %v432 = vpop.permute.xlu0 %431
    %v434 = vsub.f32 %v33, %v432
    %436 = vset.pattern.permute.xlu0 23
    %437 = vperm.xlu0 %436, %v428
    %v438 = vpop.permute.xlu0 %437
    %v440 = vmul.f32 %v406, %v438
    %v441 = vmul.f32 %v407, %v438
    %443 = vset.pattern.permute.xlu0 24
    %444 = vperm.xlu0 %443, %v434
    %v445 = vpop.permute.xlu0 %444
    %v447 = vadd.f32 %v440, %v445
    %v448 = vadd.f32 %v441, %v445
    %v449 = vsub.f32 0.0, %v447
    %v450 = vsub.f32 0.0, %v448
    %v451 = vmul.f32 %v449, 1.442695
    %v452 = vpow.pop %v451
    %v453 = vmul.f32 %v450, 1.442695
    %v454 = vpow.pop %v453
    %v455 = vadd.f32 %v452, 1.0
    %v456 = vadd.f32 %v454, 1.0
    %v457 = vrcp.pop %v455
    %v458 = vrcp.pop %v456
    %v461 = vcombine.low %v457, %v458
    %v463 = vunpack.c.l.s4 1966171168
    %v464 = vunpack.c.0.s8 %v463
    %v465 = vlaneseq
    %v466 = vshrl.u32 %v465, 7
    %v467 = vsub.s32 %v464, %v466
    %v468 = vrot.slane %v461, %v467
    %v470 = vunpack.c.l.s4 1966171168
    %v471 = vunpack.c.0.s8 %v470
    %v472 = vlaneseq
    %v473 = vshrl.u32 %v472, 7
    %v474 = vsub.s32 %v471, %v473
    %v475 = vrot.slane %v468, %v474
    %v477 = vlaneseq
    %vm478 = vcmp.ge.s32.totalorder %v477, 0
    %vm479 = vcmp.lt.s32.totalorder %v477, 256
    %vm480 = vmand %vm478, %vm479
    %481 = vst.msk [vmem:[#allocation5] sm:$0x3] %vm480, %v475
    // Predicated region
    $region14: #{uti_prediction.2} parent=1 // pred_check
      _
    $region15: #{uti_prediction.2} parent=1 // pred_check_branch
      %483 = sbr.rel (0) target = $region17
    $region16: #{uti_prediction.2} parent=1 // pred_region
      %s485 = ssub.s32 32, 32
      %486 = vsyncadd [#allocation4], %s485
      %s488 = sshll.u32 [#allocation5], 4
      %s489 = int_to_ptr.vmem [resolvable:$true] %s488
      %491 = dma.vmem_to_hbm [thread:$0]  %s489, 32, %s2, [#allocation4]
    $region17: #{uti_prediction.2} parent=1 // pred_fallthru
      _
    // Predicated region
    $region18: #{uti_prediction.2} parent=1 // pred_check
      _
    $region19: #{uti_prediction.2} parent=1 // pred_check_branch
      %493 = sbr.rel (0) target = $region21
    $region20: #{uti_prediction.2} parent=1 // pred_region
      %494 = dma.done [#allocation4], 32
    $region21: #{uti_prediction.2} parent=1 // pred_fallthru
      _
    %495 = vsyncpa [#allocation3], 1
    %496 = vsyncpa [#allocation4], 1

</llo_original>
